<compile_context>
chip_gen: v6e
topology: v6e:2x2x1
jax: 0.10.0
libtpu: 0.0.40
codegen_flags: <defaults>
</compile_context>

<pallas_src>
import functools

import jax
import jax.numpy as jnp
from jax import lax
from jax.experimental import pallas as pl
from jax.experimental.pallas import tpu as pltpu


def _round_up(x, m):
    return ((x + m - 1) // m) * m


def _sublane_align(dtype):
    # rows per packed sublane tile: f32 -> 8, bf16 -> 16, int8/fp8 -> 32
    return 8 * max(1, 4 // jnp.dtype(dtype).itemsize)


def _pet_self_output_kernel(x_ref, wt_ref, params_ref, res_ref, o_ref, *,
                            eps, mm_dtype):
    # x_ref:      (TM, H) hidden_states tile (activation dtype)
    # wt_ref:     (H, H)  dense weight pre-transposed to (in, out), mm dtype
    # params_ref: (3, H)  f32 rows: [bias, gamma, beta]
    # res_ref:    (TM, H) input_tensor (residual) tile
    # o_ref:      (TM, H) output tile
    x = x_ref[...]
    if x.dtype != mm_dtype:
        x = x.astype(mm_dtype)
    # dense: x @ W.T (W.T already materialized). f32 accumulation on the MXU.
    dense = jnp.dot(x, wt_ref[...], preferred_element_type=jnp.float32)

    bias = params_ref[0:1, :]
    gamma = params_ref[1:2, :]
    beta = params_ref[2:3, :]

    # dropout(p) in eval mode is the identity.
    # TODO(synk): training-mode dropout (stateful PRNG mask) not implemented.

    # bias + residual add in f32
    y = dense + bias + res_ref[...].astype(jnp.float32)

    # Two-pass LayerNorm statistics (mean subtracted before the variance
    # reduction) for PyTorch-matching numerics; rsqrt lands on the EUP.
    inv_h = jnp.float32(1.0 / y.shape[-1])
    mean = jnp.sum(y, axis=-1, keepdims=True) * inv_h
    centered = y - mean
    var = jnp.sum(centered * centered, axis=-1, keepdims=True) * inv_h
    norm = centered * lax.rsqrt(var + eps)

    o_ref[...] = (norm * gamma + beta).astype(o_ref.dtype)


def prepare_pet_self_output_params(weight, bias, gamma, beta, act_dtype,
                                    matmul_in_bf16=False):
    """One-time parameter preparation (call at load time, NOT per forward).

    weight: (H, H) in PyTorch (out, in) layout.  Returns:
      wt:     (H, H) in (in, out) layout, cast to the matmul input dtype
      params: (3, H) f32, rows = [bias, gamma, beta]
    """
    mm_dtype = jnp.bfloat16 if matmul_in_bf16 else jnp.dtype(act_dtype)
    wt = jnp.asarray(weight).T.astype(mm_dtype)
    params = jnp.stack([jnp.asarray(bias), jnp.asarray(gamma),
                        jnp.asarray(beta)]).astype(jnp.float32)
    return wt, params


def pet_bert_self_output(hidden_states, input_tensor, wt, params, *,
                         eps=1e-12, tile_tokens=None):
    """hidden_states, input_tensor: (B, S, H); wt: (H, H) (in, out); params: (3, H)."""
    B, S, H = hidden_states.shape
    T = B * S
    act_dtype = hidden_states.dtype
    mm_dtype = wt.dtype
    assert wt.shape == (H, H), "weight must be pre-transposed to (in, out)"
    assert params.shape == (3, H), "params must be packed [bias; gamma; beta]"

    x2d = hidden_states.reshape(T, H)
    r2d = input_tensor.reshape(T, H)

    align = _sublane_align(act_dtype)
    act_bytes = jnp.dtype(act_dtype).itemsize
    mm_bytes = jnp.dtype(mm_dtype).itemsize

    # Per-generation defaults + explicit VMEM budget.
    try:
        vmem_cap = int(pltpu.get_tpu_info().vmem_capacity_bytes)
    except Exception:  # not fatal; assume v7x-like 64 MiB
        vmem_cap = 64 << 20
    if tile_tokens is None:
        tile_tokens = 1024 if vmem_cap >= (100 << 20) else 512

    TM = max(align, (int(tile_tokens) // align) * align)
    TM = min(TM, _round_up(T, align))

    def _footprint(tm):
        streamed = 2 * 3 * tm * H * act_bytes      # x, residual, out (double-buffered)
        resident = H * H * mm_bytes                # weight (single-buffered)
        resident += 2 * 8 * H * 4                  # packed (3,H) params (sublane-padded)
        return streamed + resident

    budget = int(vmem_cap * 0.7)
    while TM > align and _footprint(TM) > budget:
        TM = max(align, ((TM // 2) // align) * align)

    # Only pad when the whole problem is smaller than one tile (tiny inputs);
    # otherwise rely on Pallas' masked handling of the ragged last block.
    T_work = T
    if TM > T:
        T_work = TM
        pad = T_work - T
        x2d = jnp.pad(x2d, ((0, pad), (0, 0)))
        r2d = jnp.pad(r2d, ((0, pad), (0, 0)))

    grid = (pl.cdiv(T_work, TM),)
    kernel = functools.partial(_pet_self_output_kernel, eps=float(eps),
                               mm_dtype=mm_dtype)

    vmem_limit = min(max(int(_footprint(TM) * 1.5) + (4 << 20), 16 << 20),
                     min(vmem_cap, 128 << 20))

    bytes_accessed = (3 * T_work * H * act_bytes   # read x, res; write out
                      + H * H * mm_bytes + 3 * H * 4)
    cost = pl.CostEstimate(
        flops=2 * T_work * H * H,
        transcendentals=T_work,
        bytes_accessed=int(bytes_accessed),
    )

    def _make_call(single_buffer_resident):
        resident_kw = ({"pipeline_mode": pl.Buffered(1)}
                       if single_buffer_resident else {})
        return pl.pallas_call(
            kernel,
            out_shape=jax.ShapeDtypeStruct((T_work, H), act_dtype),
            grid_spec=pltpu.PrefetchScalarGridSpec(
                num_scalar_prefetch=0,
                grid=grid,
                in_specs=[
                    pl.BlockSpec((TM, H), lambda i: (i, 0)),              # x tile
                    pl.BlockSpec((H, H), lambda i: (0, 0), **resident_kw),  # weight
                    pl.BlockSpec((3, H), lambda i: (0, 0), **resident_kw),  # bias/gamma/beta
                    pl.BlockSpec((TM, H), lambda i: (i, 0)),              # residual tile
                ],
                out_specs=pl.BlockSpec((TM, H), lambda i: (i, 0)),
            ),
            compiler_params=pltpu.CompilerParams(
                dimension_semantics=("parallel",),
                vmem_limit_bytes=vmem_limit,
            ),
            cost_estimate=cost,
        )

    try:
        out = _make_call(True)(x2d, wt, params, r2d)
    except Exception:
        # Fallback if this JAX build rejects Buffered(1) on resident operands.
        out = _make_call(False)(x2d, wt, params, r2d)

    if T_work != T:
        out = out[:T]
    return out.reshape(B, S, H)


def _reference(hidden_states, input_tensor, weight, bias, gamma, beta,
               eps=1e-12):
    h = jnp.einsum("bsh,oh->bso", hidden_states.astype(jnp.float32),
                   weight.astype(jnp.float32)) + bias
    y = h + input_tensor.astype(jnp.float32)
    mean = jnp.mean(y, axis=-1, keepdims=True)
    var = jnp.mean((y - mean) ** 2, axis=-1, keepdims=True)
    return (y - mean) * lax.rsqrt(var + eps) * gamma + beta


if __name__ == "__main__":
    eps = 1e-12
    key = jax.random.PRNGKey(0)
    k1, k2, k3, k4, k5, k6, k7, k8 = jax.random.split(key, 8)

    B, S, H = 2, 8, 32
    hidden_states = jax.random.normal(k1, (B, S, H), dtype=jnp.float32)
    input_tensor = jax.random.normal(k2, (B, S, H), dtype=jnp.float32)
    # deterministic "trained" parameters (shapes from PETLinear / LayerNorm)
    weight = jax.random.normal(k3, (H, H), dtype=jnp.float32) * 0.05
    bias = jax.random.normal(k4, (H,), dtype=jnp.float32) * 0.05
    gamma = 1.0 + 0.1 * jax.random.normal(k5, (H,), dtype=jnp.float32)
    beta = 0.1 * jax.random.normal(k6, (H,), dtype=jnp.float32)

    # One-time parameter prep (transpose/cast + packing) outside the forward.
    wt, params = prepare_pet_self_output_params(weight, bias, gamma, beta,
                                                hidden_states.dtype)

    # Case 1: aligned token count (single full tile).
    out = pet_bert_self_output(hidden_states, input_tensor, wt, params, eps=eps)
    out = jax.block_until_ready(out)
    ref = _reference(hidden_states, input_tensor, weight, bias, gamma, beta, eps)
    assert out.shape == (B, S, H)
    assert jnp.allclose(out, ref, atol=2e-4, rtol=2e-4), "mismatch vs reference"

    # Case 2: ragged token count (T=13, TM=8) exercising the masked last block
    # (no out-of-kernel pad/slice copies).
    B2, S2 = 1, 13
    hs2 = jax.random.normal(k7, (B2, S2, H), dtype=jnp.float32)
    res2 = jax.random.normal(k8, (B2, S2, H), dtype=jnp.float32)
    out2 = pet_bert_self_output(hs2, res2, wt, params, eps=eps, tile_tokens=8)
    out2 = jax.block_until_ready(out2)
    ref2 = _reference(hs2, res2, weight, bias, gamma, beta, eps)
    assert out2.shape == (B2, S2, H)
    assert jnp.allclose(out2, ref2, atol=2e-4, rtol=2e-4), "ragged mismatch"

    print("KERNEL_OK")
</pallas_src>

<mosaic_0001>
module attributes {stable_mosaic.version = 11 : i64} {
  func.func @_pet_self_output_kernel(%arg0: i32, %arg1: memref<16x32xf32, #tpu.memory_space<vmem>>, %arg2: memref<32x32xf32, #tpu.memory_space<vmem>>, %arg3: memref<3x32xf32, #tpu.memory_space<vmem>>, %arg4: memref<16x32xf32, #tpu.memory_space<vmem>>, %arg5: memref<16x32xf32, #tpu.memory_space<vmem>>) attributes {dimension_semantics = [#tpu.dimension_semantics<parallel>], iteration_bounds = array<i64: 1>, scalar_prefetch = 0 : i64, scratch_operands = 0 : i64, tpu.core_type = #tpu.core_type<tc>, window_params = [{transform_indices = @transform_0, window_bounds = array<i64: 16, 32>}, {pipeline_mode = #tpu.pipeline_mode<synchronous>, transform_indices = @transform_1, window_bounds = array<i64: 32, 32>}, {pipeline_mode = #tpu.pipeline_mode<synchronous>, transform_indices = @transform_2, window_bounds = array<i64: 3, 32>}, {transform_indices = @transform_3, window_bounds = array<i64: 16, 32>}, {transform_indices = @transform_4, window_bounds = array<i64: 16, 32>}]} {
    %c0 = arith.constant 0 : index
    %c0_0 = arith.constant 0 : index
    %0 = vector.load %arg1[%c0, %c0_0] : memref<16x32xf32, #tpu.memory_space<vmem>>, vector<16x32xf32>
    %c0_1 = arith.constant 0 : index
    %c0_2 = arith.constant 0 : index
    %1 = vector.load %arg2[%c0_1, %c0_2] : memref<32x32xf32, #tpu.memory_space<vmem>>, vector<32x32xf32>
    %cst = arith.constant dense<0.000000e+00> : vector<16x32xf32>
    %2 = tpu.matmul %0, %1, %cst {dimension_numbers = #tpu.dot_dimension_numbers<[1], [0], [0], [1], [0, 0, 1, 1], [], []>} : vector<16x32xf32>, vector<32x32xf32>, vector<16x32xf32> -> vector<16x32xf32>
    %c0_3 = arith.constant 0 : index
    %c0_4 = arith.constant 0 : index
    %3 = vector.load %arg3[%c0_3, %c0_4] : memref<3x32xf32, #tpu.memory_space<vmem>>, vector<1x32xf32>
    %c1 = arith.constant 1 : index
    %c0_5 = arith.constant 0 : index
    %4 = vector.load %arg3[%c1, %c0_5] : memref<3x32xf32, #tpu.memory_space<vmem>>, vector<1x32xf32>
    %c2 = arith.constant 2 : index
    %c0_6 = arith.constant 0 : index
    %5 = vector.load %arg3[%c2, %c0_6] : memref<3x32xf32, #tpu.memory_space<vmem>>, vector<1x32xf32>
    %6 = vector.broadcast %3 : vector<1x32xf32> to vector<16x32xf32>
    %7 = arith.addf %2, %6 : vector<16x32xf32>
    %c0_7 = arith.constant 0 : index
    %c0_8 = arith.constant 0 : index
    %8 = vector.load %arg4[%c0_7, %c0_8] : memref<16x32xf32, #tpu.memory_space<vmem>>, vector<16x32xf32>
    %9 = arith.addf %7, %8 : vector<16x32xf32>
    %cst_9 = arith.constant dense<0.000000e+00> : vector<16xf32>
    %10 = vector.multi_reduction <add>, %9, %cst_9 [1] : vector<16x32xf32> to vector<16xf32>
    %11 = vector.shape_cast %10 : vector<16xf32> to vector<16x1xf32>
    %cst_10 = arith.constant 3.125000e-02 : f32
    %12 = vector.broadcast %cst_10 : f32 to vector<16x1xf32>
    %13 = arith.mulf %11, %12 : vector<16x1xf32>
    %14 = vector.broadcast %13 : vector<16x1xf32> to vector<16x32xf32>
    %15 = arith.subf %9, %14 : vector<16x32xf32>
    %16 = arith.mulf %15, %15 : vector<16x32xf32>
    %cst_11 = arith.constant dense<0.000000e+00> : vector<16xf32>
    %17 = vector.multi_reduction <add>, %16, %cst_11 [1] : vector<16x32xf32> to vector<16xf32>
    %18 = vector.shape_cast %17 : vector<16xf32> to vector<16x1xf32>
    %cst_12 = arith.constant 3.125000e-02 : f32
    %19 = vector.broadcast %cst_12 : f32 to vector<16x1xf32>
    %20 = arith.mulf %18, %19 : vector<16x1xf32>
    %cst_13 = arith.constant 9.99999996E-13 : f32
    %21 = vector.broadcast %cst_13 : f32 to vector<16x1xf32>
    %22 = arith.addf %20, %21 : vector<16x1xf32>
    %23 = math.rsqrt %22 : vector<16x1xf32>
    %24 = vector.broadcast %23 : vector<16x1xf32> to vector<16x32xf32>
    %25 = arith.mulf %15, %24 : vector<16x32xf32>
    %26 = vector.broadcast %4 : vector<1x32xf32> to vector<16x32xf32>
    %27 = arith.mulf %25, %26 : vector<16x32xf32>
    %28 = vector.broadcast %5 : vector<1x32xf32> to vector<16x32xf32>
    %29 = arith.addf %27, %28 : vector<16x32xf32>
    %c0_14 = arith.constant 0 : index
    %c0_15 = arith.constant 0 : index
    %30 = vector.load %arg5[%c0_14, %c0_15] : memref<16x32xf32, #tpu.memory_space<vmem>>, vector<16x32xf32>
    tpu.vector_store %arg5[%c0_14, %c0_15], %29 {strides = array<i32>} : memref<16x32xf32, #tpu.memory_space<vmem>>, vector<16x32xf32>,
    return
  }
  func.func @transform_0(%arg0: i32) -> (i32, i32) {
    %c0_i32 = arith.constant 0 : i32
    %c0_i32_0 = arith.constant 0 : i32
    return %arg0, %c0_i32 : i32, i32
  }
  func.func @transform_1(%arg0: i32) -> (i32, i32) {
    %c0_i32 = arith.constant 0 : i32
    %c0_i32_0 = arith.constant 0 : i32
    %c0_i32_1 = arith.constant 0 : i32
    return %c0_i32, %c0_i32_0 : i32, i32
  }
  func.func @transform_2(%arg0: i32) -> (i32, i32) {
    %c0_i32 = arith.constant 0 : i32
    %c0_i32_0 = arith.constant 0 : i32
    %c0_i32_1 = arith.constant 0 : i32
    return %c0_i32, %c0_i32_0 : i32, i32
  }
  func.func @transform_3(%arg0: i32) -> (i32, i32) {
    %c0_i32 = arith.constant 0 : i32
    %c0_i32_0 = arith.constant 0 : i32
    return %arg0, %c0_i32 : i32, i32
  }
  func.func @transform_4(%arg0: i32) -> (i32, i32) {
    %c0_i32 = arith.constant 0 : i32
    %c0_i32_0 = arith.constant 0 : i32
    return %arg0, %c0_i32 : i32, i32
  }
}

module attributes {stable_mosaic.version = 11 : i64} {
  func.func @_pet_self_output_kernel(%arg0: i32, %arg1: memref<16x32xf32, #tpu.memory_space<vmem>>, %arg2: memref<32x32xf32, #tpu.memory_space<vmem>>, %arg3: memref<3x32xf32, #tpu.memory_space<vmem>>, %arg4: memref<16x32xf32, #tpu.memory_space<vmem>>, %arg5: memref<16x32xf32, #tpu.memory_space<vmem>>) attributes {dimension_semantics = [#tpu.dimension_semantics<parallel>], iteration_bounds = array<i64: 1>, scalar_prefetch = 0 : i64, scratch_operands = 0 : i64, tpu.core_type = #tpu.core_type<tc>, window_params = [{transform_indices = @transform_0, window_bounds = array<i64: 16, 32>}, {pipeline_mode = #tpu.pipeline_mode<synchronous>, transform_indices = @transform_1, window_bounds = array<i64: 32, 32>}, {pipeline_mode = #tpu.pipeline_mode<synchronous>, transform_indices = @transform_2, window_bounds = array<i64: 3, 32>}, {transform_indices = @transform_3, window_bounds = array<i64: 16, 32>}, {transform_indices = @transform_4, window_bounds = array<i64: 16, 32>}]} {
    %c0 = arith.constant 0 : index
    %c0_0 = arith.constant 0 : index
    %0 = vector.load %arg1[%c0, %c0_0] : memref<16x32xf32, #tpu.memory_space<vmem>>, vector<16x32xf32>
    %c0_1 = arith.constant 0 : index
    %c0_2 = arith.constant 0 : index
    %1 = vector.load %arg2[%c0_1, %c0_2] : memref<32x32xf32, #tpu.memory_space<vmem>>, vector<32x32xf32>
    %cst = arith.constant dense<0.000000e+00> : vector<16x32xf32>
    %2 = tpu.matmul %0, %1, %cst {dimension_numbers = #tpu.dot_dimension_numbers<[1], [0], [0], [1], [0, 0, 1, 1], [], []>} : vector<16x32xf32>, vector<32x32xf32>, vector<16x32xf32> -> vector<16x32xf32>
    %c0_3 = arith.constant 0 : index
    %c0_4 = arith.constant 0 : index
    %3 = vector.load %arg3[%c0_3, %c0_4] : memref<3x32xf32, #tpu.memory_space<vmem>>, vector<1x32xf32>
    %c1 = arith.constant 1 : index
    %c0_5 = arith.constant 0 : index
    %4 = vector.load %arg3[%c1, %c0_5] : memref<3x32xf32, #tpu.memory_space<vmem>>, vector<1x32xf32>
    %c2 = arith.constant 2 : index
    %c0_6 = arith.constant 0 : index
    %5 = vector.load %arg3[%c2, %c0_6] : memref<3x32xf32, #tpu.memory_space<vmem>>, vector<1x32xf32>
    %6 = vector.broadcast %3 : vector<1x32xf32> to vector<16x32xf32>
    %7 = arith.addf %2, %6 : vector<16x32xf32>
    %c0_7 = arith.constant 0 : index
    %c0_8 = arith.constant 0 : index
    %8 = vector.load %arg4[%c0_7, %c0_8] : memref<16x32xf32, #tpu.memory_space<vmem>>, vector<16x32xf32>
    %9 = arith.addf %7, %8 : vector<16x32xf32>
    %cst_9 = arith.constant dense<0.000000e+00> : vector<16xf32>
    %10 = vector.multi_reduction <add>, %9, %cst_9 [1] : vector<16x32xf32> to vector<16xf32>
    %11 = vector.shape_cast %10 : vector<16xf32> to vector<16x1xf32>
    %cst_10 = arith.constant 3.125000e-02 : f32
    %12 = vector.broadcast %cst_10 : f32 to vector<16x1xf32>
    %13 = arith.mulf %11, %12 : vector<16x1xf32>
    %14 = vector.broadcast %13 : vector<16x1xf32> to vector<16x32xf32>
    %15 = arith.subf %9, %14 : vector<16x32xf32>
    %16 = arith.mulf %15, %15 : vector<16x32xf32>
    %cst_11 = arith.constant dense<0.000000e+00> : vector<16xf32>
    %17 = vector.multi_reduction <add>, %16, %cst_11 [1] : vector<16x32xf32> to vector<16xf32>
    %18 = vector.shape_cast %17 : vector<16xf32> to vector<16x1xf32>
    %cst_12 = arith.constant 3.125000e-02 : f32
    %19 = vector.broadcast %cst_12 : f32 to vector<16x1xf32>
    %20 = arith.mulf %18, %19 : vector<16x1xf32>
    %cst_13 = arith.constant 9.99999996E-13 : f32
    %21 = vector.broadcast %cst_13 : f32 to vector<16x1xf32>
    %22 = arith.addf %20, %21 : vector<16x1xf32>
    %23 = math.rsqrt %22 : vector<16x1xf32>
    %24 = vector.broadcast %23 : vector<16x1xf32> to vector<16x32xf32>
    %25 = arith.mulf %15, %24 : vector<16x32xf32>
    %26 = vector.broadcast %4 : vector<1x32xf32> to vector<16x32xf32>
    %27 = arith.mulf %25, %26 : vector<16x32xf32>
    %28 = vector.broadcast %5 : vector<1x32xf32> to vector<16x32xf32>
    %29 = arith.addf %27, %28 : vector<16x32xf32>
    %c0_14 = arith.constant 0 : index
    %c0_15 = arith.constant 0 : index
    %30 = vector.load %arg5[%c0_14, %c0_15] : memref<16x32xf32, #tpu.memory_space<vmem>>, vector<16x32xf32>
    tpu.vector_store %arg5[%c0_14, %c0_15], %29 {strides = array<i32>} : memref<16x32xf32, #tpu.memory_space<vmem>>, vector<16x32xf32>,
    return
  }
  func.func @transform_0(%arg0: i32) -> (i32, i32) {
    %c0_i32 = arith.constant 0 : i32
    %c0_i32_0 = arith.constant 0 : i32
    return %arg0, %c0_i32 : i32, i32
  }
  func.func @transform_1(%arg0: i32) -> (i32, i32) {
    %c0_i32 = arith.constant 0 : i32
    %c0_i32_0 = arith.constant 0 : i32
    %c0_i32_1 = arith.constant 0 : i32
    return %c0_i32, %c0_i32_0 : i32, i32
  }
  func.func @transform_2(%arg0: i32) -> (i32, i32) {
    %c0_i32 = arith.constant 0 : i32
    %c0_i32_0 = arith.constant 0 : i32
    %c0_i32_1 = arith.constant 0 : i32
    return %c0_i32, %c0_i32_0 : i32, i32
  }
  func.func @transform_3(%arg0: i32) -> (i32, i32) {
    %c0_i32 = arith.constant 0 : i32
    %c0_i32_0 = arith.constant 0 : i32
    return %arg0, %c0_i32 : i32, i32
  }
  func.func @transform_4(%arg0: i32) -> (i32, i32) {
    %c0_i32 = arith.constant 0 : i32
    %c0_i32_0 = arith.constant 0 : i32
    return %arg0, %c0_i32 : i32, i32
  }
}

</mosaic_0001>

<llo_original>
// kernel: tpu_custom_call.1
$region0: #{tpu_custom_call.1}
  #allocation0 [shape = 'u32[]', space=smem, size = 0x4, offset = 0x4, fixed_abs, tag = 'smem constant byte address 0x4 - core index']
  #allocation1 [shape = 'u32[144,128]{1,0:T(1,128)}', space=vmem, size = 0x12000, scoped, tag = 'internal scratch']
  %s0 = inlined_call_operand.hbm [shape: f32[16,32], index: 0, kind: input, shape index: {}]
  %s1 = inlined_call_operand.hbm [shape: f32[32,32], index: 1, kind: input, shape index: {}]
  %s2 = inlined_call_operand.hbm [shape: f32[3,32], index: 2, kind: input, shape index: {}]
  %s3 = inlined_call_operand.hbm [shape: f32[16,32], index: 3, kind: input, shape index: {}]
  %s4 = inlined_call_operand.hbm [shape: f32[16,32], index: 4, kind: output, shape index: {}]
  %s5 = sld [smem:[#allocation0]]
  $region42: #{tpu_custom_call.1} parent=0
    _
  %s7 = ssub.s32 1, %s5
  %s8 = scalar_select 0, %s7, %s5
  $region1: #{tpu_custom_call.1} parent=0
    #allocation2 [shape = 'u8[8192]{0}', space=vmem, size = 0x2000, scoped, tag = 'input window, operand 0, single buffered']
    #allocation3 [shape = 's32[1]{0}', space=sflag, size = 0x4, scoped, tag = 'scoped memory for tpu_custom_call.1']
    #allocation4 [shape = 's32[1]{0}', space=sflag, size = 0x4, scoped, tag = 'scoped memory for tpu_custom_call.1']
    #allocation5 [shape = 'u8[16384]{0}', space=vmem, size = 0x4000, scoped, tag = 'input window, operand 1, single buffered']
    #allocation6 [shape = 's32[1]{0}', space=sflag, size = 0x4, scoped, tag = 'scoped memory for tpu_custom_call.1']
    #allocation7 [shape = 'u8[2048]{0}', space=vmem, size = 0x800, scoped, tag = 'input window, operand 2, single buffered']
    #allocation8 [shape = 'u8[8192]{0}', space=vmem, size = 0x2000, scoped, tag = 'input window, operand 3, single buffered']
    #allocation9 [shape = 's32[1]{0}', space=sflag, size = 0x4, scoped, tag = 'scoped memory for tpu_custom_call.1']
    #allocation10 [shape = 'u8[8192]{0}', space=vmem, size = 0x2000, scoped, tag = 'output window, operand 0, single buffered']
    %9 = vsyncpa [#allocation3], 0
    %10 = vsyncpa [#allocation6], 0
    %11 = vsyncpa [#allocation9], 0
    %12 = vsyncpa [#allocation4], 0
    // Predicated region
    $region2: #{tpu_custom_call.1} parent=1 // pred_check
      _
    $region3: #{tpu_custom_call.1} parent=1 // pred_check_branch
      %14 = sbr.rel (0) target = $region5
    $region4: #{tpu_custom_call.1} parent=1 // pred_region
      %s16 = ssub.s32 256, 256
      %17 = vsyncadd [#allocation3], %s16
      %s18 = sshll.u32 [#allocation2], 4
      %s19 = int_to_ptr.vmem [resolvable:$true] %s18
      %24 = dma.hbm_to_vmem [thread:$0]  %s0, 256, %s19, [#allocation3], 128, 128, 8
    $region5: #{tpu_custom_call.1} parent=1 // pred_fallthru
      _
    // Predicated region
    $region6: #{tpu_custom_call.1} parent=1 // pred_check
      _
    $region7: #{tpu_custom_call.1} parent=1 // pred_check_branch
      %26 = sbr.rel (0) target = $region9
    $region8: #{tpu_custom_call.1} parent=1 // pred_region
      %s28 = ssub.s32 512, 512
      %29 = vsyncadd [#allocation6], %s28
      %s30 = sshll.u32 [#allocation5], 4
      %s31 = int_to_ptr.vmem [resolvable:$true] %s30
      %36 = dma.hbm_to_vmem [thread:$0]  %s1, 512, %s31, [#allocation6], 128, 128, 8
    $region9: #{tpu_custom_call.1} parent=1 // pred_fallthru
      _
    // Predicated region
    $region10: #{tpu_custom_call.1} parent=1 // pred_check
      _
    $region11: #{tpu_custom_call.1} parent=1 // pred_check_branch
      %38 = sbr.rel (0) target = $region13
    $region12: #{tpu_custom_call.1} parent=1 // pred_region
      %s40 = ssub.s32 64, 64
      %41 = vsyncadd [#allocation6], %s40
      %s43 = sshll.u32 [#allocation7], 4
      %s44 = int_to_ptr.vmem [resolvable:$true] %s43
      %46 = dma.hbm_to_vmem [thread:$0]  %s2, 64, %s44, [#allocation6]
    $region13: #{tpu_custom_call.1} parent=1 // pred_fallthru
      _
    // Predicated region
    $region14: #{tpu_custom_call.1} parent=1 // pred_check
      _
    $region15: #{tpu_custom_call.1} parent=1 // pred_check_branch
      %48 = sbr.rel (0) target = $region17
    $region16: #{tpu_custom_call.1} parent=1 // pred_region
      %s50 = ssub.s32 256, 256
      %51 = vsyncadd [#allocation9], %s50
      %s52 = sshll.u32 [#allocation8], 4
      %s53 = int_to_ptr.vmem [resolvable:$true] %s52
      %58 = dma.hbm_to_vmem [thread:$0]  %s3, 256, %s53, [#allocation9], 128, 128, 8
    $region17: #{tpu_custom_call.1} parent=1 // pred_fallthru
      _
    // Predicated region
    $region18: #{tpu_custom_call.1} parent=1 // pred_check
      _
    $region19: #{tpu_custom_call.1} parent=1 // pred_check_branch
      %60 = sbr.rel (0) target = $region21
    $region20: #{tpu_custom_call.1} parent=1 // pred_region
      %61 = dma.done [#allocation3], 256
    $region21: #{tpu_custom_call.1} parent=1 // pred_fallthru
      _
    // Predicated region
    $region22: #{tpu_custom_call.1} parent=1 // pred_check
      _
    $region23: #{tpu_custom_call.1} parent=1 // pred_check_branch
      %63 = sbr.rel (0) target = $region25
    $region24: #{tpu_custom_call.1} parent=1 // pred_region
      %64 = dma.done [#allocation6], 512
    $region25: #{tpu_custom_call.1} parent=1 // pred_fallthru
      _
    // Predicated region
    $region26: #{tpu_custom_call.1} parent=1 // pred_check
      _
    $region27: #{tpu_custom_call.1} parent=1 // pred_check_branch
      %66 = sbr.rel (0) target = $region29
    $region28: #{tpu_custom_call.1} parent=1 // pred_region
      %67 = dma.done [#allocation6], 64
    $region29: #{tpu_custom_call.1} parent=1 // pred_fallthru
      _
    // Predicated region
    $region30: #{tpu_custom_call.1} parent=1 // pred_check
      _
    $region31: #{tpu_custom_call.1} parent=1 // pred_check_branch
      %69 = sbr.rel (0) target = $region33
    $region32: #{tpu_custom_call.1} parent=1 // pred_region
      %70 = dma.done [#allocation9], 256
    $region33: #{tpu_custom_call.1} parent=1 // pred_fallthru
      _
    %v71 = vld [vmem:[#allocation2] sm:$0xff]
    %v72 = vld [vmem:[#allocation2 + $0x8] sm:$0xff]
    %v73 = vld [vmem:[#allocation5] sm:$0xff]
    %v74 = vld [vmem:[#allocation5 + $0x8] sm:$0xff]
    %v75 = vld [vmem:[#allocation5 + $0x10] sm:$0xff]
    %v76 = vld [vmem:[#allocation5 + $0x18] sm:$0xff]
    %v77 = vld [vmem:[#allocation7] sm:$0x1]
    %v78 = vld [vmem:[#allocation7 + $0x1] sm:$0x1]
    %v79 = vld [vmem:[#allocation7 + $0x2] sm:$0x1]
    %v80 = vlaneseq
    %v81 = vshrl.u32 %v80, 7
    %v82 = vsub.s32 0, %v81
    %v83 = vrot.slane %v77, %v82
    %vm84 = vcmask 261120
    %v86 = vsel %vm84, %v71, 0
    %v89 = vsel %vm84, %v72, 0
    %91 = vmatprep.subr.mxu0 0.0
    %92 = vmatpush1.msra.mxu0 0.0
    %93 = vmatprep.subr.mxu0 0.0
    %94 = vmatpush1.msra.mxu0 0.0
    %95 = vmatprep.subr.mxu0 0.0
    %96 = vmatpush1.msra.mxu0 0.0
    %97 = vmatprep.subr.mxu0 0.0
    %98 = vmatpush1.msra.mxu0 0.0
    %99 = vmatprep.subr.mxu0 0.0
    %100 = vmatpush1.msra.mxu0 0.0
    %101 = vmatprep.subr.mxu0 0.0
    %102 = vmatpush1.msra.mxu0 0.0
    %103 = vmatprep.subr.mxu0 0.0
    %104 = vmatpush1.msra.mxu0 0.0
    %105 = vmatprep.subr.mxu0 0.0
    %106 = vmatpush1.msra.mxu0 0.0
    %107 = vmatprep.subr.mxu0 0.0
    %108 = vmatpush1.msra.mxu0 0.0
    %109 = vmatprep.subr.mxu0 0.0
    %110 = vmatpush1.msra.mxu0 0.0
    %111 = vmatprep.subr.mxu0 0.0
    %112 = vmatpush1.msra.mxu0 0.0
    %113 = vmatprep.subr.mxu0 0.0
    %114 = vmatpush1.msra.mxu0 0.0
    %115 = vmatprep.subr.mxu0 0.0
    %116 = vmatpush1.msra.mxu0 %v76
    %117 = vmatprep.subr.mxu0 0.0
    %118 = vmatpush1.msra.mxu0 %v75
    %119 = vmatprep.subr.mxu0 0.0
    %120 = vmatpush1.msra.mxu0 %v74
    %121 = vmatprep.subr.mxu0 0.0
    %122 = vmatpush1.msra.mxu0 %v73
    %123 = vmatprep.subr.mxu0 0.0
    %124 = vmatpush2.msra.mxu0 0.0
    %125 = vmatprep.subr.mxu0 0.0
    %126 = vmatpush2.msra.mxu0 0.0
    %127 = vmatprep.subr.mxu0 0.0
    %128 = vmatpush2.msra.mxu0 0.0
    %129 = vmatprep.subr.mxu0 0.0
    %130 = vmatpush2.msra.mxu0 0.0
    %131 = vmatprep.subr.mxu0 0.0
    %132 = vmatpush2.msra.mxu0 0.0
    %133 = vmatprep.subr.mxu0 0.0
    %134 = vmatpush2.msra.mxu0 0.0
    %135 = vmatprep.subr.mxu0 0.0
    %136 = vmatpush2.msra.mxu0 0.0
    %137 = vmatprep.subr.mxu0 0.0
    %138 = vmatpush2.msra.mxu0 0.0
    %139 = vmatprep.subr.mxu0 0.0
    %140 = vmatpush2.msra.mxu0 0.0
    %141 = vmatprep.subr.mxu0 0.0
    %142 = vmatpush2.msra.mxu0 0.0
    %143 = vmatprep.subr.mxu0 0.0
    %144 = vmatpush2.msra.mxu0 0.0
    %145 = vmatprep.subr.mxu0 0.0
    %146 = vmatpush2.msra.mxu0 0.0
    %147 = vmatprep.subr.mxu0 0.0
    %148 = vmatpush2.msra.mxu0 0.0
    %149 = vmatprep.subr.mxu0 0.0
    %150 = vmatpush2.msra.mxu0 0.0
    %151 = vmatprep.subr.mxu0 0.0
    %152 = vmatpush2.msra.mxu0 0.0
    %153 = vmatprep.subr.mxu0 0.0
    %154 = vmatpush2.msra.mxu0 0.0
    %155 = vmatprep.mubr.f32.mxu0 0.0
    %156 = vmatmul.mubr.f32.gmra.mxu0 %v86
    %v157 = vpop.f32.mrf.mxu0
    %v158 = vadd.f32 %v83, %v157
    %v159 = vpop.f32.mrf.mxu0
    %160 = vmatprep.mubr.f32.mxu0 0.0
    %161 = vmatmul.mubr.f32.gmra.mxu0 %v89
    %v162 = vpop.f32.mrf.mxu0
    %v163 = vadd.f32 %v83, %v162
    %v164 = vpop.f32.mrf.mxu0
    %165 = vdwg.mxu0
    %v166 = vld [vmem:[#allocation8] sm:$0xff]
    %v167 = vld [vmem:[#allocation8 + $0x8] sm:$0xff]
    %v168 = vadd.f32 %v158, %v166
    %v169 = vadd.f32 %v163, %v167
    %v170 = vsel %vm84, %v168, 0.0
    %171 = vadd.xlane.f32.xlu0 %v170
    %v172 = vpop.xlane.xlu0 %171
    %v173 = vsel %vm84, %v169, 0.0
    %174 = vadd.xlane.f32.xlu0 %v173
    %v175 = vpop.xlane.xlu0 %174
    %v176 = vmul.f32 %v172, 0.03125
    %v177 = vmul.f32 %v175, 0.03125
    %v178 = vsub.f32 %v168, %v176
    %v179 = vsub.f32 %v169, %v177
    %v180 = vmul.f32 %v178, %v178
    %v181 = vmul.f32 %v179, %v179
    %v182 = vsel %vm84, %v180, 0.0
    %183 = vadd.xlane.f32.xlu0 %v182
    %v184 = vpop.xlane.xlu0 %183
    %v185 = vsel %vm84, %v181, 0.0
    %186 = vadd.xlane.f32.xlu0 %v185
    %v187 = vpop.xlane.xlu0 %186
    %v188 = vmul.f32 %v184, 0.03125
    %v189 = vmul.f32 %v187, 0.03125
    %v190 = vadd.f32 %v188, 1e-12
    %v191 = vadd.f32 %v189, 1e-12
    %v192 = vrsqrt.pop %v190
    %v193 = vrsqrt.pop %v191
    %v194 = vmul.f32 %v178, %v192
    %v195 = vmul.f32 %v179, %v193
    %v196 = vlaneseq
    %v197 = vshrl.u32 %v196, 7
    %v198 = vsub.s32 0, %v197
    %v199 = vrot.slane %v78, %v198
    %v200 = vmul.f32 %v194, %v199
    %v201 = vmul.f32 %v195, %v199
    %v202 = vlaneseq
    %v203 = vshrl.u32 %v202, 7
    %v204 = vsub.s32 0, %v203
    %v205 = vrot.slane %v79, %v204
    %v206 = vadd.f32 %v200, %v205
    %v207 = vadd.f32 %v201, %v205
    %208 = vst.msk [vmem:[#allocation10] sm:$0xff] %vm84, %v206
    %209 = vst.msk [vmem:[#allocation10 + $0x8] sm:$0xff] %vm84, %v207
    // Predicated region
    $region34: #{tpu_custom_call.1} parent=1 // pred_check
      _
    $region35: #{tpu_custom_call.1} parent=1 // pred_check_branch
      %211 = sbr.rel (0) target = $region37
    $region36: #{tpu_custom_call.1} parent=1 // pred_region
      %s213 = ssub.s32 256, 256
      %214 = vsyncadd [#allocation4], %s213
      %s215 = sshll.u32 [#allocation10], 4
      %s216 = int_to_ptr.vmem [resolvable:$true] %s215
      %221 = dma.vmem_to_hbm [thread:$0]  %s216, 256, %s4, [#allocation4], 128, 128, 8
    $region37: #{tpu_custom_call.1} parent=1 // pred_fallthru
      _
    // Predicated region
    $region38: #{tpu_custom_call.1} parent=1 // pred_check
      _
    $region39: #{tpu_custom_call.1} parent=1 // pred_check_branch
      %223 = sbr.rel (0) target = $region41
    $region40: #{tpu_custom_call.1} parent=1 // pred_region
      %224 = dma.done [#allocation4], 256
    $region41: #{tpu_custom_call.1} parent=1 // pred_fallthru
      _
    %225 = vsyncpa [#allocation3], 1
    %226 = vsyncpa [#allocation6], 1
    %227 = vsyncpa [#allocation9], 1
    %228 = vsyncpa [#allocation4], 1

// kernel: tpu_custom_call.1
$region0: #{tpu_custom_call.1}
  #allocation0 [shape = 'u32[]', space=smem, size = 0x4, offset = 0x4, fixed_abs, tag = 'smem constant byte address 0x4 - core index']
  #allocation1 [shape = 'u32[144,128]{1,0:T(1,128)}', space=vmem, size = 0x12000, scoped, tag = 'internal scratch']
  %s0 = inlined_call_operand.hbm [shape: f32[16,32], index: 0, kind: input, shape index: {}]
  %s1 = inlined_call_operand.hbm [shape: f32[32,32], index: 1, kind: input, shape index: {}]
  %s2 = inlined_call_operand.hbm [shape: f32[3,32], index: 2, kind: input, shape index: {}]
  %s3 = inlined_call_operand.hbm [shape: f32[16,32], index: 3, kind: input, shape index: {}]
  %s4 = inlined_call_operand.hbm [shape: f32[16,32], index: 4, kind: output, shape index: {}]
  %s5 = sld [smem:[#allocation0]]
  $region42: #{tpu_custom_call.1} parent=0
    _
  %s7 = ssub.s32 1, %s5
  %s8 = scalar_select 0, %s7, %s5
  $region1: #{tpu_custom_call.1} parent=0
    #allocation2 [shape = 'u8[8192]{0}', space=vmem, size = 0x2000, scoped, tag = 'input window, operand 0, single buffered']
    #allocation3 [shape = 's32[1]{0}', space=sflag, size = 0x4, scoped, tag = 'scoped memory for tpu_custom_call.1']
    #allocation4 [shape = 's32[1]{0}', space=sflag, size = 0x4, scoped, tag = 'scoped memory for tpu_custom_call.1']
    #allocation5 [shape = 'u8[16384]{0}', space=vmem, size = 0x4000, scoped, tag = 'input window, operand 1, single buffered']
    #allocation6 [shape = 's32[1]{0}', space=sflag, size = 0x4, scoped, tag = 'scoped memory for tpu_custom_call.1']
    #allocation7 [shape = 'u8[2048]{0}', space=vmem, size = 0x800, scoped, tag = 'input window, operand 2, single buffered']
    #allocation8 [shape = 'u8[8192]{0}', space=vmem, size = 0x2000, scoped, tag = 'input window, operand 3, single buffered']
    #allocation9 [shape = 's32[1]{0}', space=sflag, size = 0x4, scoped, tag = 'scoped memory for tpu_custom_call.1']
    #allocation10 [shape = 'u8[8192]{0}', space=vmem, size = 0x2000, scoped, tag = 'output window, operand 0, single buffered']
    %9 = vsyncpa [#allocation3], 0
    %10 = vsyncpa [#allocation6], 0
    %11 = vsyncpa [#allocation9], 0
    %12 = vsyncpa [#allocation4], 0
    // Predicated region
    $region2: #{tpu_custom_call.1} parent=1 // pred_check
      _
    $region3: #{tpu_custom_call.1} parent=1 // pred_check_branch
      %14 = sbr.rel (0) target = $region5
    $region4: #{tpu_custom_call.1} parent=1 // pred_region
      %s16 = ssub.s32 256, 256
      %17 = vsyncadd [#allocation3], %s16
      %s18 = sshll.u32 [#allocation2], 4
      %s19 = int_to_ptr.vmem [resolvable:$true] %s18
      %24 = dma.hbm_to_vmem [thread:$0]  %s0, 256, %s19, [#allocation3], 128, 128, 8
    $region5: #{tpu_custom_call.1} parent=1 // pred_fallthru
      _
    // Predicated region
    $region6: #{tpu_custom_call.1} parent=1 // pred_check
      _
    $region7: #{tpu_custom_call.1} parent=1 // pred_check_branch
      %26 = sbr.rel (0) target = $region9
    $region8: #{tpu_custom_call.1} parent=1 // pred_region
      %s28 = ssub.s32 512, 512
      %29 = vsyncadd [#allocation6], %s28
      %s30 = sshll.u32 [#allocation5], 4
      %s31 = int_to_ptr.vmem [resolvable:$true] %s30
      %36 = dma.hbm_to_vmem [thread:$0]  %s1, 512, %s31, [#allocation6], 128, 128, 8
    $region9: #{tpu_custom_call.1} parent=1 // pred_fallthru
      _
    // Predicated region
    $region10: #{tpu_custom_call.1} parent=1 // pred_check
      _
    $region11: #{tpu_custom_call.1} parent=1 // pred_check_branch
      %38 = sbr.rel (0) target = $region13
    $region12: #{tpu_custom_call.1} parent=1 // pred_region
      %s40 = ssub.s32 64, 64
      %41 = vsyncadd [#allocation6], %s40
      %s43 = sshll.u32 [#allocation7], 4
      %s44 = int_to_ptr.vmem [resolvable:$true] %s43
      %46 = dma.hbm_to_vmem [thread:$0]  %s2, 64, %s44, [#allocation6]
    $region13: #{tpu_custom_call.1} parent=1 // pred_fallthru
      _
    // Predicated region
    $region14: #{tpu_custom_call.1} parent=1 // pred_check
      _
    $region15: #{tpu_custom_call.1} parent=1 // pred_check_branch
      %48 = sbr.rel (0) target = $region17
    $region16: #{tpu_custom_call.1} parent=1 // pred_region
      %s50 = ssub.s32 256, 256
      %51 = vsyncadd [#allocation9], %s50
      %s52 = sshll.u32 [#allocation8], 4
      %s53 = int_to_ptr.vmem [resolvable:$true] %s52
      %58 = dma.hbm_to_vmem [thread:$0]  %s3, 256, %s53, [#allocation9], 128, 128, 8
    $region17: #{tpu_custom_call.1} parent=1 // pred_fallthru
      _
    // Predicated region
    $region18: #{tpu_custom_call.1} parent=1 // pred_check
      _
    $region19: #{tpu_custom_call.1} parent=1 // pred_check_branch
      %60 = sbr.rel (0) target = $region21
    $region20: #{tpu_custom_call.1} parent=1 // pred_region
      %61 = dma.done [#allocation3], 256
    $region21: #{tpu_custom_call.1} parent=1 // pred_fallthru
      _
    // Predicated region
    $region22: #{tpu_custom_call.1} parent=1 // pred_check
      _
    $region23: #{tpu_custom_call.1} parent=1 // pred_check_branch
      %63 = sbr.rel (0) target = $region25
    $region24: #{tpu_custom_call.1} parent=1 // pred_region
      %64 = dma.done [#allocation6], 512
    $region25: #{tpu_custom_call.1} parent=1 // pred_fallthru
      _
    // Predicated region
    $region26: #{tpu_custom_call.1} parent=1 // pred_check
      _
    $region27: #{tpu_custom_call.1} parent=1 // pred_check_branch
      %66 = sbr.rel (0) target = $region29
    $region28: #{tpu_custom_call.1} parent=1 // pred_region
      %67 = dma.done [#allocation6], 64
    $region29: #{tpu_custom_call.1} parent=1 // pred_fallthru
      _
    // Predicated region
    $region30: #{tpu_custom_call.1} parent=1 // pred_check
      _
    $region31: #{tpu_custom_call.1} parent=1 // pred_check_branch
      %69 = sbr.rel (0) target = $region33
    $region32: #{tpu_custom_call.1} parent=1 // pred_region
      %70 = dma.done [#allocation9], 256
    $region33: #{tpu_custom_call.1} parent=1 // pred_fallthru
      _
    %v71 = vld [vmem:[#allocation2] sm:$0xff]
    %v72 = vld [vmem:[#allocation2 + $0x8] sm:$0xff]
    %v73 = vld [vmem:[#allocation5] sm:$0xff]
    %v74 = vld [vmem:[#allocation5 + $0x8] sm:$0xff]
    %v75 = vld [vmem:[#allocation5 + $0x10] sm:$0xff]
    %v76 = vld [vmem:[#allocation5 + $0x18] sm:$0xff]
    %v77 = vld [vmem:[#allocation7] sm:$0x1]
    %v78 = vld [vmem:[#allocation7 + $0x1] sm:$0x1]
    %v79 = vld [vmem:[#allocation7 + $0x2] sm:$0x1]
    %v80 = vlaneseq
    %v81 = vshrl.u32 %v80, 7
    %v82 = vsub.s32 0, %v81
    %v83 = vrot.slane %v77, %v82
    %vm84 = vcmask 261120
    %v86 = vsel %vm84, %v71, 0
    %v89 = vsel %vm84, %v72, 0
    %91 = vmatprep.subr.mxu0 0.0
    %92 = vmatpush1.msra.mxu0 0.0
    %93 = vmatprep.subr.mxu0 0.0
    %94 = vmatpush1.msra.mxu0 0.0
    %95 = vmatprep.subr.mxu0 0.0
    %96 = vmatpush1.msra.mxu0 0.0
    %97 = vmatprep.subr.mxu0 0.0
    %98 = vmatpush1.msra.mxu0 0.0
    %99 = vmatprep.subr.mxu0 0.0
    %100 = vmatpush1.msra.mxu0 0.0
    %101 = vmatprep.subr.mxu0 0.0
    %102 = vmatpush1.msra.mxu0 0.0
    %103 = vmatprep.subr.mxu0 0.0
    %104 = vmatpush1.msra.mxu0 0.0
    %105 = vmatprep.subr.mxu0 0.0
    %106 = vmatpush1.msra.mxu0 0.0
    %107 = vmatprep.subr.mxu0 0.0
    %108 = vmatpush1.msra.mxu0 0.0
    %109 = vmatprep.subr.mxu0 0.0
    %110 = vmatpush1.msra.mxu0 0.0
    %111 = vmatprep.subr.mxu0 0.0
    %112 = vmatpush1.msra.mxu0 0.0
    %113 = vmatprep.subr.mxu0 0.0
    %114 = vmatpush1.msra.mxu0 0.0
    %115 = vmatprep.subr.mxu0 0.0
    %116 = vmatpush1.msra.mxu0 %v76
    %117 = vmatprep.subr.mxu0 0.0
    %118 = vmatpush1.msra.mxu0 %v75
    %119 = vmatprep.subr.mxu0 0.0
    %120 = vmatpush1.msra.mxu0 %v74
    %121 = vmatprep.subr.mxu0 0.0
    %122 = vmatpush1.msra.mxu0 %v73
    %123 = vmatprep.subr.mxu0 0.0
    %124 = vmatpush2.msra.mxu0 0.0
    %125 = vmatprep.subr.mxu0 0.0
    %126 = vmatpush2.msra.mxu0 0.0
    %127 = vmatprep.subr.mxu0 0.0
    %128 = vmatpush2.msra.mxu0 0.0
    %129 = vmatprep.subr.mxu0 0.0
    %130 = vmatpush2.msra.mxu0 0.0
    %131 = vmatprep.subr.mxu0 0.0
    %132 = vmatpush2.msra.mxu0 0.0
    %133 = vmatprep.subr.mxu0 0.0
    %134 = vmatpush2.msra.mxu0 0.0
    %135 = vmatprep.subr.mxu0 0.0
    %136 = vmatpush2.msra.mxu0 0.0
    %137 = vmatprep.subr.mxu0 0.0
    %138 = vmatpush2.msra.mxu0 0.0
    %139 = vmatprep.subr.mxu0 0.0
    %140 = vmatpush2.msra.mxu0 0.0
    %141 = vmatprep.subr.mxu0 0.0
    %142 = vmatpush2.msra.mxu0 0.0
    %143 = vmatprep.subr.mxu0 0.0
    %144 = vmatpush2.msra.mxu0 0.0
    %145 = vmatprep.subr.mxu0 0.0
    %146 = vmatpush2.msra.mxu0 0.0
    %147 = vmatprep.subr.mxu0 0.0
    %148 = vmatpush2.msra.mxu0 0.0
    %149 = vmatprep.subr.mxu0 0.0
    %150 = vmatpush2.msra.mxu0 0.0
    %151 = vmatprep.subr.mxu0 0.0
    %152 = vmatpush2.msra.mxu0 0.0
    %153 = vmatprep.subr.mxu0 0.0
    %154 = vmatpush2.msra.mxu0 0.0
    %155 = vmatprep.mubr.f32.mxu0 0.0
    %156 = vmatmul.mubr.f32.gmra.mxu0 %v86
    %v157 = vpop.f32.mrf.mxu0
    %v158 = vadd.f32 %v83, %v157
    %v159 = vpop.f32.mrf.mxu0
    %160 = vmatprep.mubr.f32.mxu0 0.0
    %161 = vmatmul.mubr.f32.gmra.mxu0 %v89
    %v162 = vpop.f32.mrf.mxu0
    %v163 = vadd.f32 %v83, %v162
    %v164 = vpop.f32.mrf.mxu0
    %165 = vdwg.mxu0
    %v166 = vld [vmem:[#allocation8] sm:$0xff]
    %v167 = vld [vmem:[#allocation8 + $0x8] sm:$0xff]
    %v168 = vadd.f32 %v158, %v166
    %v169 = vadd.f32 %v163, %v167
    %v170 = vsel %vm84, %v168, 0.0
    %171 = vadd.xlane.f32.xlu0 %v170
    %v172 = vpop.xlane.xlu0 %171
    %v173 = vsel %vm84, %v169, 0.0
    %174 = vadd.xlane.f32.xlu0 %v173
    %v175 = vpop.xlane.xlu0 %174
    %v176 = vmul.f32 %v172, 0.03125
    %v177 = vmul.f32 %v175, 0.03125
    %v178 = vsub.f32 %v168, %v176
    %v179 = vsub.f32 %v169, %v177
    %v180 = vmul.f32 %v178, %v178
    %v181 = vmul.f32 %v179, %v179
    %v182 = vsel %vm84, %v180, 0.0
    %183 = vadd.xlane.f32.xlu0 %v182
    %v184 = vpop.xlane.xlu0 %183
    %v185 = vsel %vm84, %v181, 0.0
    %186 = vadd.xlane.f32.xlu0 %v185
    %v187 = vpop.xlane.xlu0 %186
    %v188 = vmul.f32 %v184, 0.03125
    %v189 = vmul.f32 %v187, 0.03125
    %v190 = vadd.f32 %v188, 1e-12
    %v191 = vadd.f32 %v189, 1e-12
    %v192 = vrsqrt.pop %v190
    %v193 = vrsqrt.pop %v191
    %v194 = vmul.f32 %v178, %v192
    %v195 = vmul.f32 %v179, %v193
    %v196 = vlaneseq
    %v197 = vshrl.u32 %v196, 7
    %v198 = vsub.s32 0, %v197
    %v199 = vrot.slane %v78, %v198
    %v200 = vmul.f32 %v194, %v199
    %v201 = vmul.f32 %v195, %v199
    %v202 = vlaneseq
    %v203 = vshrl.u32 %v202, 7
    %v204 = vsub.s32 0, %v203
    %v205 = vrot.slane %v79, %v204
    %v206 = vadd.f32 %v200, %v205
    %v207 = vadd.f32 %v201, %v205
    %208 = vst.msk [vmem:[#allocation10] sm:$0xff] %vm84, %v206
    %209 = vst.msk [vmem:[#allocation10 + $0x8] sm:$0xff] %vm84, %v207
    // Predicated region
    $region34: #{tpu_custom_call.1} parent=1 // pred_check
      _
    $region35: #{tpu_custom_call.1} parent=1 // pred_check_branch
      %211 = sbr.rel (0) target = $region37
    $region36: #{tpu_custom_call.1} parent=1 // pred_region
      %s213 = ssub.s32 256, 256
      %214 = vsyncadd [#allocation4], %s213
      %s215 = sshll.u32 [#allocation10], 4
      %s216 = int_to_ptr.vmem [resolvable:$true] %s215
      %221 = dma.vmem_to_hbm [thread:$0]  %s216, 256, %s4, [#allocation4], 128, 128, 8
    $region37: #{tpu_custom_call.1} parent=1 // pred_fallthru
      _
    // Predicated region
    $region38: #{tpu_custom_call.1} parent=1 // pred_check
      _
    $region39: #{tpu_custom_call.1} parent=1 // pred_check_branch
      %223 = sbr.rel (0) target = $region41
    $region40: #{tpu_custom_call.1} parent=1 // pred_region
      %224 = dma.done [#allocation4], 256
    $region41: #{tpu_custom_call.1} parent=1 // pred_fallthru
      _
    %225 = vsyncpa [#allocation3], 1
    %226 = vsyncpa [#allocation6], 1
    %227 = vsyncpa [#allocation9], 1
    %228 = vsyncpa [#allocation4], 1

</llo_original>
